<compile_context>
chip_gen: v5e
topology: v5e:2x2
jax: 0.10.0
libtpu: 0.0.40
codegen_flags: <defaults>
</compile_context>

<pallas_src>
import functools

import jax
import jax.numpy as jnp
from jax.experimental import pallas as pl
from jax.experimental.pallas import tpu as pltpu


LIN_K_BLOCK = 512  # K-chunk of the linear contraction streamed per grid step.


# ----------------------------- Pallas kernel -------------------------------


def _fused_wd_kernel(colT_ref, cw_ref, cm_ref, cb_ref, lw_ref, lm_ref, lb_ref,
                     o_ref, h2_ref, *, N, HW, Cout):
    """Fused WeightDropConv2d -> ReLU -> flatten -> WeightDropLinear.

    colT_ref: [KH*KW*Cin, N*H*W]  transposed im2col slab (lane-dense)
    cw_ref  : [Cout, KH*KW*Cin]   conv weight, (ci,kh,kw)-major columns
    cm_ref  : [Cout, KH*KW*Cin]   conv dropout mask, bf16, values {0, 1/(1-p)}
    cb_ref  : [Cout, 1]           conv bias (NOT dropped)
    lw_ref  : [blk, F_out]        k-th chunk of lin_w.T (torch flatten order)
    lm_ref  : [blk, F_out]        k-th chunk of lin mask.T, bf16, {0, 1/(1-p)}
    lb_ref  : [1, F_out]          linear bias (NOT dropped)
    o_ref   : [N, F_out]          f32 output / accumulator (resident across k)
    h2_ref  : [N, Cout*HW]        VMEM scratch: flattened ReLU(conv) activations
    """
    k = pl.program_id(0)
    blk = lw_ref.shape[0]

    @pl.when(k == 0)
    def _():
        # F.dropout(weight, p, training=True) == mask * weight / (1 - p);
        # 1/(1-p) is already baked into the bf16 mask.
        cw_eff = cw_ref[...] * cm_ref[...].astype(jnp.float32)
        convT = jnp.dot(cw_eff, colT_ref[...],
                        preferred_element_type=jnp.float32) + cb_ref[...]
        hT = jnp.maximum(convT, 0.0)                 # [Cout, N*HW], lane-dense

        # torch.flatten of the NCHW conv output: j = c*HW + hw.  Per-sample,
        # the dense [Cout, HW] slab is merged into one Cout*HW-lane row
        # (4 vregs -> 16 vregs) — no 64-vreg lane-sparse gather.
        rows = [hT[:, n * HW:(n + 1) * HW].reshape(1, Cout * HW)
                for n in range(N)]
        h2_ref[...] = jnp.concatenate(rows, axis=0)
        o_ref[...] = jnp.zeros_like(o_ref)

    # WeightDropLinear: K split across the grid so lw/lm DMA pipelines behind
    # the conv (k == 0) and behind earlier chunks.
    lw_eff = lw_ref[...] * lm_ref[...].astype(jnp.float32)
    start = pl.multiple_of(k * blk, blk)
    o_ref[...] += jnp.dot(h2_ref[:, pl.ds(start, blk)], lw_eff,
                          preferred_element_type=jnp.float32)

    @pl.when(k == pl.num_programs(0) - 1)
    def _():
        o_ref[...] += lb_ref[...]


# ------------------------------ JAX wrapper ---------------------------------


def prepare_static_operands(params):
    """One-time layout of the static weights/biases (hoist out of the MC loop)."""
    Cout, Cin, KH, KW = params["conv_w"].shape
    return {
        "cw": params["conv_w"].reshape(Cout, Cin * KH * KW),  # (ci,kh,kw)-major
        "cb": params["conv_b"].reshape(Cout, 1),
        "lw": params["lin_w"].T,                              # [F_in, F_out]
        "lb": params["lin_b"].reshape(1, -1),
    }


@functools.partial(jax.jit, static_argnames=("p",))
def mc_dropout_connect_forward(x_nchw, static_ops, masks, p):
    """Forward of MCDropoutConnectModule(parent, ['Conv2d','Linear'], p)."""
    N, Cin, H, W = x_nchw.shape
    Cout, _, KH, KW = masks["conv_mask"].shape
    F_out, F_in = masks["lin_mask"].shape
    HW = H * W
    assert F_in == Cout * HW
    pad = (KH - 1) // 2                               # padding=1 for k=3
    inv_keep = 1.0 / (1.0 - p)

    # ---- per-forward layout plumbing (XLA, outside the kernel) ----
    # Transposed im2col: row k = ci*KH*KW + kh*KW + kw, column = n*HW + y*W + x.
    xp = jnp.pad(x_nchw, ((0, 0), (0, 0), (pad, pad), (pad, pad)))
    pats = [xp[:, :, kh:kh + H, kw:kw + W]
            for kh in range(KH) for kw in range(KW)]       # each [N, Cin, H, W]
    colT = jnp.stack(pats, axis=2).transpose(1, 2, 0, 3, 4).reshape(
        Cin * KH * KW, N * HW)

    # Dropout masks: bake 1/(1-p) in (exact in bf16 for p = 0.5), ship as bf16.
    # For p where 1/(1-p) is not bf16-exact, ship 0/1 masks and scale in-kernel.
    cm = (masks["conv_mask"].reshape(Cout, Cin * KH * KW).astype(jnp.float32)
          * inv_keep).astype(jnp.bfloat16)
    lm = (masks["lin_mask"].T.astype(jnp.float32) * inv_keep).astype(jnp.bfloat16)

    blk = LIN_K_BLOCK if F_in % LIN_K_BLOCK == 0 else F_in
    n_k = F_in // blk

    kernel = functools.partial(_fused_wd_kernel, N=N, HW=HW, Cout=Cout)

    flops = 2 * Cout * (Cin * KH * KW) * (N * HW) + 2 * N * F_in * F_out
    bytes_accessed = (colT.size * 4 + static_ops["cw"].size * 4 + cm.size * 2
                      + Cout * 4 + static_ops["lw"].size * 4 + lm.size * 2
                      + F_out * 4 + N * F_out * 4)

    return pl.pallas_call(
        kernel,
        grid=(n_k,),
        in_specs=[
            pl.BlockSpec(colT.shape, lambda k: (0, 0)),
            pl.BlockSpec((Cout, Cin * KH * KW), lambda k: (0, 0)),
            pl.BlockSpec((Cout, Cin * KH * KW), lambda k: (0, 0)),
            pl.BlockSpec((Cout, 1), lambda k: (0, 0)),
            pl.BlockSpec((blk, F_out), lambda k: (k, 0)),
            pl.BlockSpec((blk, F_out), lambda k: (k, 0)),
            pl.BlockSpec((1, F_out), lambda k: (0, 0)),
        ],
        out_specs=pl.BlockSpec((N, F_out), lambda k: (0, 0)),
        out_shape=jax.ShapeDtypeStruct((N, F_out), jnp.float32),
        scratch_shapes=[pltpu.VMEM((N, Cout * HW), jnp.float32)],
        compiler_params=pltpu.CompilerParams(
            dimension_semantics=("arbitrary",)),
        cost_estimate=pl.CostEstimate(flops=flops, transcendentals=0,
                                      bytes_accessed=bytes_accessed),
    )(colT, static_ops["cw"], cm, static_ops["cb"],
      static_ops["lw"], lm, static_ops["lb"])


# --------------------------- pure-JAX reference ------------------------------


def _reference(x, params, masks, p):
    keep = 1.0 - p
    w_eff = params["conv_w"] * masks["conv_mask"] / keep
    y = jax.lax.conv_general_dilated(
        x, w_eff, window_strides=(1, 1), padding=((1, 1), (1, 1)),
        dimension_numbers=("NCHW", "OIHW", "NCHW"))
    y = jnp.maximum(y + params["conv_b"][None, :, None, None], 0.0)
    yf = y.reshape(x.shape[0], -1)                   # torch.flatten (C,H,W order)
    wl = params["lin_w"] * masks["lin_mask"] / keep
    return yf @ wl.T + params["lin_b"][None, :]


# ---------------------------------- main -------------------------------------


if __name__ == "__main__":
    N, Cin, H, W = 2, 4, 16, 16
    Cout, KH, KW = 8, 3, 3
    F_in, F_out = Cout * H * W, 32
    p = 0.5

    key = jax.random.PRNGKey(0)
    kx, kcw, kcb, klw, klb, kmc, kml = jax.random.split(key, 7)

    x = jax.random.normal(kx, (N, Cin, H, W), dtype=jnp.float32)

    params = {
        "conv_w": jax.random.normal(kcw, (Cout, Cin, KH, KW), jnp.float32) * 0.1,
        "conv_b": jax.random.normal(kcb, (Cout,), jnp.float32) * 0.1,
        "lin_w": jax.random.normal(klw, (F_out, F_in), jnp.float32) * 0.02,
        "lin_b": jax.random.normal(klb, (F_out,), jnp.float32) * 0.1,
    }
    # F.dropout(weight, p, training=True): Bernoulli(keep) mask per forward.
    # TODO(synk): the torch module resamples the mask each forward via its own
    # RNG; here it is supplied explicitly (could move in-kernel with
    # pltpu.prng_seed/prng_random_bits at the cost of bit-exact parity).
    masks = {
        "conv_mask": jax.random.bernoulli(kmc, 1.0 - p, (Cout, Cin, KH, KW)).astype(jnp.float32),
        "lin_mask": jax.random.bernoulli(kml, 1.0 - p, (F_out, F_in)).astype(jnp.float32),
    }

    static_ops = prepare_static_operands(params)     # hoisted out of the MC loop
    out = mc_dropout_connect_forward(x, static_ops, masks, p)
    out = jax.block_until_ready(out)

    ref = _reference(x, params, masks, p)
    assert out.shape == (N, F_out) and out.dtype == jnp.float32
    assert jnp.allclose(out, ref, rtol=1e-3, atol=1e-3), "mismatch vs JAX reference"

    print("KERNEL_OK")
</pallas_src>

<mosaic_0001>
module attributes {stable_mosaic.version = 11 : i64} {
  func.func @_fused_wd_kernel(%arg0: i32, %arg1: memref<36x512xf32, #tpu.memory_space<vmem>>, %arg2: memref<8x36xf32, #tpu.memory_space<vmem>>, %arg3: memref<8x36xbf16, #tpu.memory_space<vmem>>, %arg4: memref<8x1xf32, #tpu.memory_space<vmem>>, %arg5: memref<512x32xf32, #tpu.memory_space<vmem>>, %arg6: memref<512x32xbf16, #tpu.memory_space<vmem>>, %arg7: memref<1x32xf32, #tpu.memory_space<vmem>>, %arg8: memref<2x32xf32, #tpu.memory_space<vmem>>, %arg9: memref<2x2048xf32, #tpu.memory_space<vmem>>) attributes {dimension_semantics = [#tpu.dimension_semantics<arbitrary>], iteration_bounds = array<i64: 4>, scalar_prefetch = 0 : i64, scratch_operands = 1 : i64, tpu.core_type = #tpu.core_type<tc>, window_params = [{pipeline_mode = #tpu.pipeline_mode<synchronous>, transform_indices = @transform_0, window_bounds = array<i64: 36, 512>}, {pipeline_mode = #tpu.pipeline_mode<synchronous>, transform_indices = @transform_1, window_bounds = array<i64: 8, 36>}, {pipeline_mode = #tpu.pipeline_mode<synchronous>, transform_indices = @transform_2, window_bounds = array<i64: 8, 36>}, {pipeline_mode = #tpu.pipeline_mode<synchronous>, transform_indices = @transform_3, window_bounds = array<i64: 8, 1>}, {transform_indices = @transform_4, window_bounds = array<i64: 512, 32>}, {transform_indices = @transform_5, window_bounds = array<i64: 512, 32>}, {pipeline_mode = #tpu.pipeline_mode<synchronous>, transform_indices = @transform_6, window_bounds = array<i64: 1, 32>}, {pipeline_mode = #tpu.pipeline_mode<synchronous>, transform_indices = @transform_7, window_bounds = array<i64: 2, 32>}]} {
    %c0_i32 = arith.constant 0 : i32
    %0 = arith.cmpi eq, %arg0, %c0_i32 : i32
    %1 = arith.extui %0 : i1 to i32
    %c0_i32_0 = arith.constant 0 : i32
    %2 = arith.cmpi ne, %1, %c0_i32_0 : i32
    scf.if %2 {
      %c0_10 = arith.constant 0 : index
      %c0_11 = arith.constant 0 : index
      %18 = vector.load %arg2[%c0_10, %c0_11] : memref<8x36xf32, #tpu.memory_space<vmem>>, vector<8x36xf32>
      %c0_12 = arith.constant 0 : index
      %c0_13 = arith.constant 0 : index
      %19 = vector.load %arg3[%c0_12, %c0_13] : memref<8x36xbf16, #tpu.memory_space<vmem>>, vector<8x36xbf16>
      %20 = arith.extf %19 : vector<8x36xbf16> to vector<8x36xf32>
      %21 = arith.mulf %18, %20 : vector<8x36xf32>
      %c0_14 = arith.constant 0 : index
      %c0_15 = arith.constant 0 : index
      %22 = vector.load %arg1[%c0_14, %c0_15] : memref<36x512xf32, #tpu.memory_space<vmem>>, vector<36x512xf32>
      %cst_16 = arith.constant dense<0.000000e+00> : vector<8x512xf32>
      %23 = tpu.matmul %21, %22, %cst_16 {dimension_numbers = #tpu.dot_dimension_numbers<[1], [0], [0], [1], [0, 0, 1, 1], [], []>} : vector<8x36xf32>, vector<36x512xf32>, vector<8x512xf32> -> vector<8x512xf32>
      %c0_17 = arith.constant 0 : index
      %c0_18 = arith.constant 0 : index
      %24 = vector.load %arg4[%c0_17, %c0_18] : memref<8x1xf32, #tpu.memory_space<vmem>>, vector<8x1xf32>
      %25 = vector.broadcast %24 : vector<8x1xf32> to vector<8x512xf32>
      %26 = arith.addf %23, %25 : vector<8x512xf32>
      %cst_19 = arith.constant 0.000000e+00 : f32
      %27 = vector.broadcast %cst_19 : f32 to vector<8x512xf32>
      %28 = arith.maximumf %26, %27 : vector<8x512xf32>
      %29 = vector.extract_strided_slice %28 {offsets = [0, 0], sizes = [8, 256], strides = [1, 1]} : vector<8x512xf32> to vector<8x256xf32>
      %30 = vector.shape_cast %29 : vector<8x256xf32> to vector<1x2048xf32>
      %31 = vector.extract_strided_slice %28 {offsets = [0, 256], sizes = [8, 256], strides = [1, 1]} : vector<8x512xf32> to vector<8x256xf32>
      %32 = vector.shape_cast %31 : vector<8x256xf32> to vector<1x2048xf32>
      %33 = tpu.concatenate %30, %32 in 0 : vector<1x2048xf32>, vector<1x2048xf32> -> vector<2x2048xf32>
      %c0_20 = arith.constant 0 : index
      %c0_21 = arith.constant 0 : index
      %34 = vector.load %arg9[%c0_20, %c0_21] : memref<2x2048xf32, #tpu.memory_space<vmem>>, vector<2x2048xf32>
      tpu.vector_store %arg9[%c0_20, %c0_21], %33 {strides = array<i32>} : memref<2x2048xf32, #tpu.memory_space<vmem>>, vector<2x2048xf32>,
      %cst_22 = arith.constant 0.000000e+00 : f32
      %35 = vector.broadcast %cst_22 : f32 to vector<2x32xf32>
      %c0_23 = arith.constant 0 : index
      %c0_24 = arith.constant 0 : index
      %36 = vector.load %arg8[%c0_23, %c0_24] : memref<2x32xf32, #tpu.memory_space<vmem>>, vector<2x32xf32>
      tpu.vector_store %arg8[%c0_23, %c0_24], %35 {strides = array<i32>} : memref<2x32xf32, #tpu.memory_space<vmem>>, vector<2x32xf32>,
    } else {
    }
    %c0 = arith.constant 0 : index
    %c0_1 = arith.constant 0 : index
    %3 = vector.load %arg5[%c0, %c0_1] : memref<512x32xf32, #tpu.memory_space<vmem>>, vector<512x32xf32>
    %c0_2 = arith.constant 0 : index
    %c0_3 = arith.constant 0 : index
    %4 = vector.load %arg6[%c0_2, %c0_3] : memref<512x32xbf16, #tpu.memory_space<vmem>>, vector<512x32xbf16>
    %5 = arith.extf %4 : vector<512x32xbf16> to vector<512x32xf32>
    %6 = arith.mulf %3, %5 : vector<512x32xf32>
    %c512_i32 = arith.constant 512 : i32
    %7 = arith.muli %arg0, %c512_i32 : i32
    %8 = tpu.assume_multiple %7, 512 : i32
    %c0_4 = arith.constant 0 : index
    %c0_5 = arith.constant 0 : index
    %9 = vector.load %arg8[%c0_4, %c0_5] : memref<2x32xf32, #tpu.memory_space<vmem>>, vector<2x32xf32>
    %c0_6 = arith.constant 0 : index
    %10 = arith.index_cast %8 : i32 to index
    %11 = vector.load %arg9[%c0_6, %10] : memref<2x2048xf32, #tpu.memory_space<vmem>>, vector<2x512xf32>
    %cst = arith.constant dense<0.000000e+00> : vector<2x32xf32>
    %12 = tpu.matmul %11, %6, %cst {dimension_numbers = #tpu.dot_dimension_numbers<[1], [0], [0], [1], [0, 0, 1, 1], [], []>} : vector<2x512xf32>, vector<512x32xf32>, vector<2x32xf32> -> vector<2x32xf32>
    %13 = arith.addf %9, %12 : vector<2x32xf32>
    %c0_7 = arith.constant 0 : index
    %c0_8 = arith.constant 0 : index
    %14 = vector.load %arg8[%c0_7, %c0_8] : memref<2x32xf32, #tpu.memory_space<vmem>>, vector<2x32xf32>
    tpu.vector_store %arg8[%c0_7, %c0_8], %13 {strides = array<i32>} : memref<2x32xf32, #tpu.memory_space<vmem>>, vector<2x32xf32>,
    %c3_i32 = arith.constant 3 : i32
    %15 = arith.cmpi eq, %arg0, %c3_i32 : i32
    %16 = arith.extui %15 : i1 to i32
    %c0_i32_9 = arith.constant 0 : i32
    %17 = arith.cmpi ne, %16, %c0_i32_9 : i32
    scf.if %17 {
      %c0_10 = arith.constant 0 : index
      %c0_11 = arith.constant 0 : index
      %18 = vector.load %arg8[%c0_10, %c0_11] : memref<2x32xf32, #tpu.memory_space<vmem>>, vector<2x32xf32>
      %c0_12 = arith.constant 0 : index
      %c0_13 = arith.constant 0 : index
      %19 = vector.load %arg7[%c0_12, %c0_13] : memref<1x32xf32, #tpu.memory_space<vmem>>, vector<1x32xf32>
      %20 = vector.broadcast %19 : vector<1x32xf32> to vector<2x32xf32>
      %21 = arith.addf %18, %20 : vector<2x32xf32>
      %c0_14 = arith.constant 0 : index
      %c0_15 = arith.constant 0 : index
      %22 = vector.load %arg8[%c0_14, %c0_15] : memref<2x32xf32, #tpu.memory_space<vmem>>, vector<2x32xf32>
      tpu.vector_store %arg8[%c0_14, %c0_15], %21 {strides = array<i32>} : memref<2x32xf32, #tpu.memory_space<vmem>>, vector<2x32xf32>,
    } else {
    }
    return
  }
  func.func @transform_0(%arg0: i32) -> (i32, i32) {
    %c0_i32 = arith.constant 0 : i32
    %c0_i32_0 = arith.constant 0 : i32
    %c0_i32_1 = arith.constant 0 : i32
    return %c0_i32, %c0_i32_0 : i32, i32
  }
  func.func @transform_1(%arg0: i32) -> (i32, i32) {
    %c0_i32 = arith.constant 0 : i32
    %c0_i32_0 = arith.constant 0 : i32
    %c0_i32_1 = arith.constant 0 : i32
    return %c0_i32, %c0_i32_0 : i32, i32
  }
  func.func @transform_2(%arg0: i32) -> (i32, i32) {
    %c0_i32 = arith.constant 0 : i32
    %c0_i32_0 = arith.constant 0 : i32
    %c0_i32_1 = arith.constant 0 : i32
    return %c0_i32, %c0_i32_0 : i32, i32
  }
  func.func @transform_3(%arg0: i32) -> (i32, i32) {
    %c0_i32 = arith.constant 0 : i32
    %c0_i32_0 = arith.constant 0 : i32
    %c0_i32_1 = arith.constant 0 : i32
    return %c0_i32, %c0_i32_0 : i32, i32
  }
  func.func @transform_4(%arg0: i32) -> (i32, i32) {
    %c0_i32 = arith.constant 0 : i32
    %c0_i32_0 = arith.constant 0 : i32
    return %arg0, %c0_i32 : i32, i32
  }
  func.func @transform_5(%arg0: i32) -> (i32, i32) {
    %c0_i32 = arith.constant 0 : i32
    %c0_i32_0 = arith.constant 0 : i32
    return %arg0, %c0_i32 : i32, i32
  }
  func.func @transform_6(%arg0: i32) -> (i32, i32) {
    %c0_i32 = arith.constant 0 : i32
    %c0_i32_0 = arith.constant 0 : i32
    %c0_i32_1 = arith.constant 0 : i32
    return %c0_i32, %c0_i32_0 : i32, i32
  }
  func.func @transform_7(%arg0: i32) -> (i32, i32) {
    %c0_i32 = arith.constant 0 : i32
    %c0_i32_0 = arith.constant 0 : i32
    %c0_i32_1 = arith.constant 0 : i32
    return %c0_i32, %c0_i32_0 : i32, i32
  }
}

</mosaic_0001>

<llo_original>
// kernel: mc_dropout_connect_forward.1
$region0: #{mc_dropout_connect_forward.1}
  #allocation0 [shape = 'u32[]', space=smem, size = 0x4, offset = 0x4, fixed_abs, tag = 'smem constant byte address 0x4 - core index']
  #allocation1 [shape = 'u32[72,128]{1,0:T(1,128)}', space=vmem, size = 0x9000, scoped, tag = 'internal scratch']
  #allocation2 [shape = 'f32[2,2048]{1,0:T(2,128)}', space=vmem, size = 0x4000, scoped, tag = 'scratch operand']
  %s0 = inlined_call_operand.vmem [shape: f32[36,512], index: 0, kind: input, shape index: {}]
  %s1 = inlined_call_operand.vmem [shape: f32[8,36], index: 1, kind: input, shape index: {}]
  %s2 = inlined_call_operand.vmem [shape: bf16[8,36], index: 2, kind: input, shape index: {}]
  %s3 = inlined_call_operand.vmem [shape: f32[8,1], index: 3, kind: input, shape index: {}]
  %s4 = inlined_call_operand.vmem [shape: f32[2048,32], index: 4, kind: input, shape index: {}]
  %s5 = inlined_call_operand.vmem [shape: bf16[2048,32], index: 5, kind: input, shape index: {}]
  %s6 = inlined_call_operand.vmem [shape: f32[1,32], index: 6, kind: input, shape index: {}]
  %s7 = inlined_call_operand.hbm [shape: f32[2,32], index: 7, kind: output, shape index: {}]
  %s8 = sld [smem:[#allocation0]]
  $region69: #{mc_dropout_connect_forward.1} parent=0
    _
  %s10 = ssub.s32 1, %s8
  %s11 = scalar_select 0, %s10, %s8
  $region1: #{mc_dropout_connect_forward.1} parent=0
    #allocation3 [shape = 'u8[1024]{0}', space=vmem, size = 0x400, scoped, tag = 'output window, operand 0, single buffered']
    #allocation4 [shape = 's32[2]{0}', space=sflag, size = 0x8, scoped, tag = 'scoped memory for mc_dropout_connect_forward.1']
    %12 = vsyncpa [#allocation4], 0
    loop: start=0, step=1, limit=6
    $region2: #{mc_dropout_connect_forward.1} parent=1 // loop_pre_header
      _
    $region3: #{mc_dropout_connect_forward.1} parent=1 // loop_header
      %s14 = sphi 0, %s18
      %p15 = scmp.ge.s32.totalorder %s14, 6
      %s22 = sphi 0, %s22
      %s24 = sphi 0, %s22
      %s25 = sphi 0, %s24
      %s39 = sphi 0, %s25
      %s43 = sphi 0, %s43
      %s45 = sphi 0, %s43
      %s46 = sphi 0, %s45
      %s60 = sphi 0, %s46
      %s64 = sphi 0, %s64
      %s66 = sphi 0, %s64
      %s67 = sphi 0, %s66
      %s81 = sphi 0, %s67
      %s85 = sphi 0, %s85
      %s87 = sphi 0, %s85
      %s88 = sphi 0, %s87
      %s102 = sphi 0, %s88
      %s108 = sphi 0, %s110
      %s111 = sphi 0, %s108
      %s112 = sphi 0, %s111
      %s128 = sphi 0, %s112
      %s134 = sphi 0, %s136
      %s137 = sphi 0, %s134
      %s138 = sphi 0, %s137
      %s154 = sphi 0, %s138
      %s158 = sphi 0, %s158
      %s160 = sphi 0, %s158
      %s161 = sphi 0, %s160
      %s175 = sphi 0, %s161
      %s179 = sphi 0, %s179
      %s181 = sphi 0, %s179
      %s182 = sphi 0, %s181
      %s196 = sphi 0, %s182
    $region4: #{mc_dropout_connect_forward.1} parent=1 // loop_header_branch
      %17 = sbr.rel (%p15) target = $region8
    $region5: #{mc_dropout_connect_forward.1} parent=1 // loop_body
      %s19 = ssub.s32 %s14, 1
      %s20 = ssub.s32 %s14, 2
      %s21 = sadd.s32 %s14, 1
      %s23 = sadd.s32 %s22, 1
      %p26 = scmp.eq.s32.totalorder %s14, 3
      %p27 = scmp.ne.s32.totalorder %s22, %s24
      %p28 = scmp.eq.s32.totalorder %s14, 0
      %p29 = por %p27, %p28
      %p30 = scmp.ne.s32.totalorder %s22, %s24
      %p31 = scmp.eq.s32.totalorder %s19, 3
      %p32 = por %p30, %p31
      %p33 = scmp.ne.s32.totalorder %s24, %s25
      %p34 = scmp.eq.s32.totalorder %s19, 0
      %p35 = por %p33, %p34
      %p36 = scmp.ne.s32.totalorder %s24, %s25
      %p37 = scmp.eq.s32.totalorder %s20, 3
      %p38 = por %p36, %p37
      %p40 = scmp.ne.s32.totalorder %s25, %s39
      %p41 = scmp.eq.s32.totalorder %s20, 0
      %p42 = por %p40, %p41
      %s44 = sadd.s32 %s43, 1
      %p47 = scmp.eq.s32.totalorder %s14, 3
      %p48 = scmp.ne.s32.totalorder %s43, %s45
      %p49 = scmp.eq.s32.totalorder %s14, 0
      %p50 = por %p48, %p49
      %p51 = scmp.ne.s32.totalorder %s43, %s45
      %p52 = scmp.eq.s32.totalorder %s19, 3
      %p53 = por %p51, %p52
      %p54 = scmp.ne.s32.totalorder %s45, %s46
      %p55 = scmp.eq.s32.totalorder %s19, 0
      %p56 = por %p54, %p55
      %p57 = scmp.ne.s32.totalorder %s45, %s46
      %p58 = scmp.eq.s32.totalorder %s20, 3
      %p59 = por %p57, %p58
      %p61 = scmp.ne.s32.totalorder %s46, %s60
      %p62 = scmp.eq.s32.totalorder %s20, 0
      %p63 = por %p61, %p62
      %s65 = sadd.s32 %s64, 1
      %p68 = scmp.eq.s32.totalorder %s14, 3
      %p69 = scmp.ne.s32.totalorder %s64, %s66
      %p70 = scmp.eq.s32.totalorder %s14, 0
      %p71 = por %p69, %p70
      %p72 = scmp.ne.s32.totalorder %s64, %s66
      %p73 = scmp.eq.s32.totalorder %s19, 3
      %p74 = por %p72, %p73
      %p75 = scmp.ne.s32.totalorder %s66, %s67
      %p76 = scmp.eq.s32.totalorder %s19, 0
      %p77 = por %p75, %p76
      %p78 = scmp.ne.s32.totalorder %s66, %s67
      %p79 = scmp.eq.s32.totalorder %s20, 3
      %p80 = por %p78, %p79
      %p82 = scmp.ne.s32.totalorder %s67, %s81
      %p83 = scmp.eq.s32.totalorder %s20, 0
      %p84 = por %p82, %p83
      %s86 = sadd.s32 %s85, 1
      %p89 = scmp.eq.s32.totalorder %s14, 3
      %p90 = scmp.ne.s32.totalorder %s85, %s87
      %p91 = scmp.eq.s32.totalorder %s14, 0
      %p92 = por %p90, %p91
      %p93 = scmp.ne.s32.totalorder %s85, %s87
      %p94 = scmp.eq.s32.totalorder %s19, 3
      %p95 = por %p93, %p94
      %p96 = scmp.ne.s32.totalorder %s87, %s88
      %p97 = scmp.eq.s32.totalorder %s19, 0
      %p98 = por %p96, %p97
      %p99 = scmp.ne.s32.totalorder %s87, %s88
      %p100 = scmp.eq.s32.totalorder %s20, 3
      %p101 = por %p99, %p100
      %p103 = scmp.ne.s32.totalorder %s88, %s102
      %p104 = scmp.eq.s32.totalorder %s20, 0
      %p105 = por %p103, %p104
      %s106 = ssub.s32 %s14, %s21
      %p107 = scmp.eq.s32.totalorder %s106, 0
      %s109 = sadd.s32 %s108, 1
      %s110 = scalar_select %p107, %s108, %s109
      %p113 = pneg %p107
      %p114 = scmp.eq.s32.totalorder %s14, 3
      %p115 = por %p113, %p114
      %p116 = scmp.ne.s32.totalorder %s108, %s111
      %p117 = scmp.eq.s32.totalorder %s14, 0
      %p118 = por %p116, %p117
      %p119 = scmp.ne.s32.totalorder %s108, %s111
      %p120 = scmp.eq.s32.totalorder %s19, 3
      %p121 = por %p119, %p120
      %p122 = scmp.ne.s32.totalorder %s111, %s112
      %p123 = scmp.eq.s32.totalorder %s19, 0
      %p124 = por %p122, %p123
      %p125 = scmp.ne.s32.totalorder %s111, %s112
      %p126 = scmp.eq.s32.totalorder %s20, 3
      %p127 = por %p125, %p126
      %p129 = scmp.ne.s32.totalorder %s112, %s128
      %p130 = scmp.eq.s32.totalorder %s20, 0
      %p131 = por %p129, %p130
      %s132 = ssub.s32 %s14, %s21
      %p133 = scmp.eq.s32.totalorder %s132, 0
      %s135 = sadd.s32 %s134, 1
      %s136 = scalar_select %p133, %s134, %s135
      %p139 = pneg %p133
      %p140 = scmp.eq.s32.totalorder %s14, 3
      %p141 = por %p139, %p140
      %p142 = scmp.ne.s32.totalorder %s134, %s137
      %p143 = scmp.eq.s32.totalorder %s14, 0
      %p144 = por %p142, %p143
      %p145 = scmp.ne.s32.totalorder %s134, %s137
      %p146 = scmp.eq.s32.totalorder %s19, 3
      %p147 = por %p145, %p146
      %p148 = scmp.ne.s32.totalorder %s137, %s138
      %p149 = scmp.eq.s32.totalorder %s19, 0
      %p150 = por %p148, %p149
      %p151 = scmp.ne.s32.totalorder %s137, %s138
      %p152 = scmp.eq.s32.totalorder %s20, 3
      %p153 = por %p151, %p152
      %p155 = scmp.ne.s32.totalorder %s138, %s154
      %p156 = scmp.eq.s32.totalorder %s20, 0
      %p157 = por %p155, %p156
      %s159 = sadd.s32 %s158, 1
      %p162 = scmp.eq.s32.totalorder %s14, 3
      %p163 = scmp.ne.s32.totalorder %s158, %s160
      %p164 = scmp.eq.s32.totalorder %s14, 0
      %p165 = por %p163, %p164
      %p166 = scmp.ne.s32.totalorder %s158, %s160
      %p167 = scmp.eq.s32.totalorder %s19, 3
      %p168 = por %p166, %p167
      %p169 = scmp.ne.s32.totalorder %s160, %s161
      %p170 = scmp.eq.s32.totalorder %s19, 0
      %p171 = por %p169, %p170
      %p172 = scmp.ne.s32.totalorder %s160, %s161
      %p173 = scmp.eq.s32.totalorder %s20, 3
      %p174 = por %p172, %p173
      %p176 = scmp.ne.s32.totalorder %s161, %s175
      %p177 = scmp.eq.s32.totalorder %s20, 0
      %p178 = por %p176, %p177
      %s180 = sadd.s32 %s179, 1
      %p183 = scmp.eq.s32.totalorder %s14, 3
      %p184 = scmp.ne.s32.totalorder %s179, %s181
      %p185 = scmp.eq.s32.totalorder %s14, 0
      %p186 = por %p184, %p185
      %p187 = scmp.ne.s32.totalorder %s179, %s181
      %p188 = scmp.eq.s32.totalorder %s19, 3
      %p189 = por %p187, %p188
      %p190 = scmp.ne.s32.totalorder %s181, %s182
      %p191 = scmp.eq.s32.totalorder %s19, 0
      %p192 = por %p190, %p191
      %p193 = scmp.ne.s32.totalorder %s181, %s182
      %p194 = scmp.eq.s32.totalorder %s20, 3
      %p195 = por %p193, %p194
      %p197 = scmp.ne.s32.totalorder %s182, %s196
      %p198 = scmp.eq.s32.totalorder %s20, 0
      %p199 = por %p197, %p198
      %p200 = scmp.le.s32.totalorder 1, %s14
      %p201 = scmp.lt.s32.totalorder %s14, 5
      %p202 = pnand %p200, %p201
      %p203 = pneg %p202
      // Predicated region
      $region9: #{mc_dropout_connect_forward.1} parent=5 // pred_check
        _
      $region10: #{mc_dropout_connect_forward.1} parent=5 // pred_check_branch
        %205 = sbr.rel (%p202) target = $region12
      $region11: #{mc_dropout_connect_forward.1} parent=5 // pred_region
        %s206 = ssub.s32 %s14, 1
        // Predicated region
        $region13: #{mc_dropout_connect_forward.1} parent=11 // pred_check
          %p207 = pneg %p35
        $region14: #{mc_dropout_connect_forward.1} parent=11 // pred_check_branch
          %209 = sbr.rel (%p207) target = $region16
        $region15: #{mc_dropout_connect_forward.1} parent=11 // pred_region
          _
        $region16: #{mc_dropout_connect_forward.1} parent=11 // pred_fallthru
          _
        // Predicated region
        $region17: #{mc_dropout_connect_forward.1} parent=11 // pred_check
          %p210 = pneg %p56
        $region18: #{mc_dropout_connect_forward.1} parent=11 // pred_check_branch
          %212 = sbr.rel (%p210) target = $region20
        $region19: #{mc_dropout_connect_forward.1} parent=11 // pred_region
          _
        $region20: #{mc_dropout_connect_forward.1} parent=11 // pred_fallthru
          _
        // Predicated region
        $region21: #{mc_dropout_connect_forward.1} parent=11 // pred_check
          %p213 = pneg %p77
        $region22: #{mc_dropout_connect_forward.1} parent=11 // pred_check_branch
          %215 = sbr.rel (%p213) target = $region24
        $region23: #{mc_dropout_connect_forward.1} parent=11 // pred_region
          _
        $region24: #{mc_dropout_connect_forward.1} parent=11 // pred_fallthru
          _
        // Predicated region
        $region25: #{mc_dropout_connect_forward.1} parent=11 // pred_check
          %p216 = pneg %p98
        $region26: #{mc_dropout_connect_forward.1} parent=11 // pred_check_branch
          %218 = sbr.rel (%p216) target = $region28
        $region27: #{mc_dropout_connect_forward.1} parent=11 // pred_region
          _
        $region28: #{mc_dropout_connect_forward.1} parent=11 // pred_fallthru
          _
        // Predicated region
        $region29: #{mc_dropout_connect_forward.1} parent=11 // pred_check
          %p219 = pneg %p171
        $region30: #{mc_dropout_connect_forward.1} parent=11 // pred_check_branch
          %221 = sbr.rel (%p219) target = $region32
        $region31: #{mc_dropout_connect_forward.1} parent=11 // pred_region
          _
        $region32: #{mc_dropout_connect_forward.1} parent=11 // pred_fallthru
          _
      $region12: #{mc_dropout_connect_forward.1} parent=5 // pred_fallthru
        _
      %p222 = scmp.lt.s32.totalorder %s14, 4
      // Predicated region
      $region33: #{mc_dropout_connect_forward.1} parent=5 // pred_check
        %p223 = pneg %p222
      $region34: #{mc_dropout_connect_forward.1} parent=5 // pred_check_branch
        %225 = sbr.rel (%p223) target = $region36
      $region35: #{mc_dropout_connect_forward.1} parent=5 // pred_region
        // Predicated region
        $region37: #{mc_dropout_connect_forward.1} parent=35 // pred_check
          %p226 = pneg %p118
        $region38: #{mc_dropout_connect_forward.1} parent=35 // pred_check_branch
          %228 = sbr.rel (%p226) target = $region40
        $region39: #{mc_dropout_connect_forward.1} parent=35 // pred_region
          %s229 = smul.u32 64, %s14
          %p230 = scmp.lt.s32.totalorder %s229, 255
          %s231 = scalar_select %p230, %s229, 255
          %s232 = smul.addr %s231, 8
          %s233 = scalar_lea.vmem %s4, %s232
          %s234 = smul.u32 64, %s14
        $region40: #{mc_dropout_connect_forward.1} parent=35 // pred_fallthru
          _
        // Predicated region
        $region41: #{mc_dropout_connect_forward.1} parent=35 // pred_check
          %p235 = pneg %p144
        $region42: #{mc_dropout_connect_forward.1} parent=35 // pred_check_branch
          %237 = sbr.rel (%p235) target = $region44
        $region43: #{mc_dropout_connect_forward.1} parent=35 // pred_region
          %s238 = smul.u32 64, %s14
          %p239 = scmp.lt.s32.totalorder %s238, 255
          %s240 = scalar_select %p239, %s238, 255
          %s241 = smul.addr %s240, 4
          %s242 = scalar_lea.vmem %s5, %s241
          %s243 = smul.u32 64, %s14
        $region44: #{mc_dropout_connect_forward.1} parent=35 // pred_fallthru
          _
      $region36: #{mc_dropout_connect_forward.1} parent=5 // pred_fallthru
        _
      %p244 = scmp.le.s32.totalorder 1, %s14
      %p245 = scmp.lt.s32.totalorder %s14, 5
      %p246 = pnand %p244, %p245
      %p247 = pneg %p246
      // Predicated region
      $region45: #{mc_dropout_connect_forward.1} parent=5 // pred_check
        _
      $region46: #{mc_dropout_connect_forward.1} parent=5 // pred_check_branch
        %249 = sbr.rel (%p246) target = $region48
      $region47: #{mc_dropout_connect_forward.1} parent=5 // pred_region
        %s250 = ssub.s32 %s14, 1
        %p251 = pneg %p35
        %p252 = pneg %p32
        %p253 = pneg %p56
        %p254 = pneg %p53
        %p255 = pneg %p77
        %p256 = pneg %p74
        %p257 = pneg %p98
        %p258 = pneg %p95
        %s259 = smul.u32 64, %s19
        %p260 = scmp.lt.s32.totalorder %s259, 255
        %s261 = scalar_select %p260, %s259, 255
        %s262 = smul.addr %s261, 8
        %s263 = scalar_lea.vmem %s4, %s262
        %p264 = pneg %p124
        %p265 = pneg %p121
        %s266 = smul.u32 64, %s19
        %p267 = scmp.lt.s32.totalorder %s266, 255
        %s268 = scalar_select %p267, %s266, 255
        %s269 = smul.addr %s268, 4
        %s270 = scalar_lea.vmem %s5, %s269
        %p271 = pneg %p150
        %p272 = pneg %p147
        %p273 = pneg %p171
        %p274 = pneg %p168
        %p275 = pneg %p192
        %p276 = pneg %p189
        %s277 = smul.u32 64, %s19
        %p278 = scmp.lt.s32.totalorder %s277, 255
        %s279 = scalar_select %p278, %s277, 255
        %s280 = smul.addr %s279, 8
        %s281 = scalar_lea.vmem %s4, %s280
        %s282 = smul.u32 64, %s19
        %s283 = smul.u32 64, %s19
        %p284 = scmp.lt.s32.totalorder %s283, 255
        %s285 = scalar_select %p284, %s283, 255
        %s286 = smul.addr %s285, 4
        %s287 = scalar_lea.vmem %s5, %s286
        %s288 = smul.u32 64, %s19
        %p289 = scmp.eq.s32.totalorder %s19, 0
        // Predicated region
        $region49: #{mc_dropout_connect_forward.1} parent=47 // pred_check
          %p290 = pneg %p289
        $region50: #{mc_dropout_connect_forward.1} parent=47 // pred_check_branch
          %292 = sbr.rel (%p290) target = $region52
        $region51: #{mc_dropout_connect_forward.1} parent=47 // pred_region
          %v293 = vld [vmem:[%s1] sm:$0xff]
          %v294 = vld [vmem:[%s2] sm:$0xf]
          %v295 = vunpack.c.l.bf16 %v294
          %v296 = vmul.f32 %v293, %v295
          %v297 = vld [vmem:[%s0] sm:$0xff]
          %v298 = vld [vmem:[%s0 + $0x8] sm:$0xff]
          %v299 = vld [vmem:[%s0 + $0x10] sm:$0xff]
          %v300 = vld [vmem:[%s0 + $0x18] sm:$0xff]
          %v301 = vld [vmem:[%s0 + $0x20] sm:$0xff]
          %v302 = vld [vmem:[%s0 + $0x28] sm:$0xff]
          %v303 = vld [vmem:[%s0 + $0x30] sm:$0xff]
          %v304 = vld [vmem:[%s0 + $0x38] sm:$0xff]
          %v305 = vld [vmem:[%s0 + $0x40] sm:$0xff]
          %v306 = vld [vmem:[%s0 + $0x48] sm:$0xff]
          %v307 = vld [vmem:[%s0 + $0x50] sm:$0xff]
          %v308 = vld [vmem:[%s0 + $0x58] sm:$0xff]
          %v309 = vld [vmem:[%s0 + $0x60] sm:$0xff]
          %v310 = vld [vmem:[%s0 + $0x68] sm:$0xff]
          %v311 = vld [vmem:[%s0 + $0x70] sm:$0xff]
          %v312 = vld [vmem:[%s0 + $0x78] sm:$0xff]
          %v313 = vld [vmem:[%s0 + $0x80] sm:$0xf]
          %v314 = vld [vmem:[%s0 + $0x88] sm:$0xf]
          %v315 = vld [vmem:[%s0 + $0x90] sm:$0xf]
          %v316 = vld [vmem:[%s0 + $0x98] sm:$0xf]
          %v317 = vld [vmem:[%s3] sm:$0xff]
          %319 = vset.pattern.permute.xlu0 0
          %320 = vperm.xlu0 %319, %v317
          %v321 = vpop.permute.xlu0 %320
          %vm323 = vcmask 293888
          %v325 = vsel %vm323, %v296, 0
          %vm327 = vcmask 1043456
          %v329 = vsel %vm327, %v313, 0
          %v332 = vsel %vm327, %v314, 0
          %v335 = vsel %vm327, %v315, 0
          %v338 = vsel %vm327, %v316, 0
          %340 = vmatpush.msra.mxu0 0.0
          %341 = vmatpush.msra.mxu0 0.0
          %342 = vmatpush.msra.mxu0 0.0
          %343 = vmatpush.msra.mxu0 0.0
          %344 = vmatpush.msra.mxu0 0.0
          %345 = vmatpush.msra.mxu0 0.0
          %346 = vmatpush.msra.mxu0 0.0
          %347 = vmatpush.msra.mxu0 0.0
          %348 = vmatpush.msra.mxu0 0.0
          %349 = vmatpush.msra.mxu0 0.0
          %350 = vmatpush.msra.mxu0 0.0
          %351 = vmatpush.msra.mxu0 %v329
          %352 = vmatpush.msra.mxu0 %v309
          %353 = vmatpush.msra.mxu0 %v305
          %354 = vmatpush.msra.mxu0 %v301
          %355 = vmatpush.msra.mxu0 %v297
          %356 = vmatmul.f32.gmra.mxu0 %v325
          %v357 = vpop.f32.mrf.mxu0
          %v358 = vadd.f32 %v321, %v357
          %359 = vdwg.mxu0
          %360 = vmatpush.msra.mxu0 0.0
          %361 = vmatpush.msra.mxu0 0.0
          %362 = vmatpush.msra.mxu0 0.0
          %363 = vmatpush.msra.mxu0 0.0
          %364 = vmatpush.msra.mxu0 0.0
          %365 = vmatpush.msra.mxu0 0.0
          %366 = vmatpush.msra.mxu0 0.0
          %367 = vmatpush.msra.mxu0 0.0
          %368 = vmatpush.msra.mxu0 0.0
          %369 = vmatpush.msra.mxu0 0.0
          %370 = vmatpush.msra.mxu0 0.0
          %371 = vmatpush.msra.mxu0 %v332
          %372 = vmatpush.msra.mxu0 %v310
          %373 = vmatpush.msra.mxu0 %v306
          %374 = vmatpush.msra.mxu0 %v302
          %375 = vmatpush.msra.mxu0 %v298
          %376 = vmatmul.f32.gmra.mxu0 %v325
          %v377 = vpop.f32.mrf.mxu0
          %v378 = vadd.f32 %v321, %v377
          %379 = vdwg.mxu0
          %380 = vmatpush.msra.mxu0 0.0
          %381 = vmatpush.msra.mxu0 0.0
          %382 = vmatpush.msra.mxu0 0.0
          %383 = vmatpush.msra.mxu0 0.0
          %384 = vmatpush.msra.mxu0 0.0
          %385 = vmatpush.msra.mxu0 0.0
          %386 = vmatpush.msra.mxu0 0.0
          %387 = vmatpush.msra.mxu0 0.0
          %388 = vmatpush.msra.mxu0 0.0
          %389 = vmatpush.msra.mxu0 0.0
          %390 = vmatpush.msra.mxu0 0.0
          %391 = vmatpush.msra.mxu0 %v335
          %392 = vmatpush.msra.mxu0 %v311
          %393 = vmatpush.msra.mxu0 %v307
          %394 = vmatpush.msra.mxu0 %v303
          %395 = vmatpush.msra.mxu0 %v299
          %396 = vmatmul.f32.gmra.mxu0 %v325
          %v397 = vpop.f32.mrf.mxu0
          %v398 = vadd.f32 %v321, %v397
          %399 = vdwg.mxu0
          %400 = vmatpush.msra.mxu0 0.0
          %401 = vmatpush.msra.mxu0 0.0
          %402 = vmatpush.msra.mxu0 0.0
          %403 = vmatpush.msra.mxu0 0.0
          %404 = vmatpush.msra.mxu0 0.0
          %405 = vmatpush.msra.mxu0 0.0
          %406 = vmatpush.msra.mxu0 0.0
          %407 = vmatpush.msra.mxu0 0.0
          %408 = vmatpush.msra.mxu0 0.0
          %409 = vmatpush.msra.mxu0 0.0
          %410 = vmatpush.msra.mxu0 0.0
          %411 = vmatpush.msra.mxu0 %v338
          %412 = vmatpush.msra.mxu0 %v312
          %413 = vmatpush.msra.mxu0 %v308
          %414 = vmatpush.msra.mxu0 %v304
          %415 = vmatpush.msra.mxu0 %v300
          %416 = vmatmul.f32.gmra.mxu0 %v325
          %v417 = vpop.f32.mrf.mxu0
          %v418 = vadd.f32 %v321, %v417
          %419 = vdwg.mxu0
          %v420 = vmax.f32 %v358, 0.0
          %v421 = vmax.f32 %v378, 0.0
          %v422 = vmax.f32 %v398, 0.0
          %v423 = vmax.f32 %v418, 0.0
          %v426 = vrot.slane %v421, 4
          %v427 = vsel %vm327, %v420, %v426
          %v428 = vsel %vm327, %v426, %v420
          %v429 = vrot.slane %v428, 4
          %v433 = vunpack.c.l.s4 1935823168
          %v434 = vunpack.c.0.s8 %v433
          %v435 = vperm.slane %v427, %v434
          %v437 = vunpack.c.l.s4 1935823168
          %v438 = vunpack.c.0.s8 %v437
          %v439 = vperm.slane %v429, %v438
          %v442 = vrot.slane %v423, 4
          %v443 = vsel %vm327, %v422, %v442
          %v444 = vsel %vm327, %v442, %v422
          %v445 = vrot.slane %v444, 4
          %v449 = vunpack.c.l.s4 1935823168
          %v450 = vunpack.c.0.s8 %v449
          %v451 = vperm.slane %v443, %v450
          %v453 = vunpack.c.l.s4 1935823168
          %v454 = vunpack.c.0.s8 %v453
          %v455 = vperm.slane %v445, %v454
          %v458 = vperm.slane %v435, 0
          %v459 = vperm.slane %v435, 1
          %v460 = vperm.slane %v435, 2
          %v461 = vperm.slane %v435, 3
          %v462 = vperm.slane %v435, 4
          %v463 = vperm.slane %v435, 5
          %v464 = vperm.slane %v435, 6
          %v465 = vperm.slane %v435, 7
          %v466 = vperm.slane %v439, 0
          %v467 = vperm.slane %v439, 1
          %v468 = vperm.slane %v439, 2
          %v469 = vperm.slane %v439, 3
          %v470 = vperm.slane %v439, 4
          %v471 = vperm.slane %v439, 5
          %v472 = vperm.slane %v439, 6
          %v473 = vperm.slane %v439, 7
          %v492 = vperm.slane %v451, 0
          %v493 = vperm.slane %v451, 1
          %v494 = vperm.slane %v451, 2
          %v495 = vperm.slane %v451, 3
          %v496 = vperm.slane %v451, 4
          %v497 = vperm.slane %v451, 5
          %v498 = vperm.slane %v451, 6
          %v499 = vperm.slane %v451, 7
          %v500 = vperm.slane %v455, 0
          %v501 = vperm.slane %v455, 1
          %v502 = vperm.slane %v455, 2
          %v503 = vperm.slane %v455, 3
          %v504 = vperm.slane %v455, 4
          %v505 = vperm.slane %v455, 5
          %v506 = vperm.slane %v455, 6
          %v507 = vperm.slane %v455, 7
          %vm524 = vcmask 1040384
          %v525 = vsel %vm524, %v458, %v492
          %v526 = vsel %vm524, %v459, %v493
          %v527 = vsel %vm524, %v460, %v494
          %v528 = vsel %vm524, %v461, %v495
          %v529 = vsel %vm524, %v462, %v496
          %v530 = vsel %vm524, %v463, %v497
          %v531 = vsel %vm524, %v464, %v498
          %v532 = vsel %vm524, %v465, %v499
          %v533 = vsel %vm524, %v466, %v500
          %v534 = vsel %vm524, %v467, %v501
          %v535 = vsel %vm524, %v468, %v502
          %v536 = vsel %vm524, %v469, %v503
          %v537 = vsel %vm524, %v470, %v504
          %v538 = vsel %vm524, %v471, %v505
          %v539 = vsel %vm524, %v472, %v506
          %v540 = vsel %vm524, %v473, %v507
          %v557 = vrot.slane %v526, 6
          %v558 = vrot.slane %v527, 4
          %v559 = vrot.slane %v528, 2
          %v560 = vrot.slane %v530, 6
          %v561 = vrot.slane %v531, 4
          %v562 = vrot.slane %v532, 2
          %v563 = vrot.slane %v534, 6
          %v564 = vrot.slane %v535, 4
          %v565 = vrot.slane %v536, 2
          %v566 = vrot.slane %v538, 6
          %v567 = vrot.slane %v539, 4
          %v568 = vrot.slane %v540, 2
          %vm569 = vcmask 1041408
          %v570 = vsel %vm569, %v525, %v557
          %vm571 = vcmask 1045508
          %v572 = vsel %vm571, %v558, %v559
          %v573 = vsel %vm327, %v570, %v572
          %v574 = vsel %vm569, %v529, %v560
          %v575 = vsel %vm571, %v561, %v562
          %v576 = vsel %vm327, %v574, %v575
          %v577 = vsel %vm569, %v533, %v563
          %v578 = vsel %vm571, %v564, %v565
          %v579 = vsel %vm327, %v577, %v578
          %v580 = vsel %vm569, %v537, %v566
          %v581 = vsel %vm571, %v567, %v568
          %v582 = vsel %vm327, %v580, %v581
          %587 = vst [vmem:[#allocation2] sm:$0xff] %v573
          %588 = vst [vmem:[#allocation2 + $0x8] sm:$0xff] %v576
          %589 = vst [vmem:[#allocation2 + $0x10] sm:$0xff] %v579
          %590 = vst [vmem:[#allocation2 + $0x18] sm:$0xff] %v582
          %vm591 = vcmask 254976
          %592 = vst.msk [vmem:[#allocation3] sm:$0x3] %vm591, 0.0
        $region52: #{mc_dropout_connect_forward.1} parent=47 // pred_fallthru
          _
        %v593 = vld [vmem:[%s281] sm:$0xff]
        %v594 = vld [vmem:[%s281 + $0x8] sm:$0xff]
        %v595 = vld [vmem:[%s281 + $0x10] sm:$0xff]
        %v596 = vld [vmem:[%s281 + $0x18] sm:$0xff]
        %v597 = vld [vmem:[%s281 + $0x20] sm:$0xff]
        %v598 = vld [vmem:[%s281 + $0x28] sm:$0xff]
        %v599 = vld [vmem:[%s281 + $0x30] sm:$0xff]
        %v600 = vld [vmem:[%s281 + $0x38] sm:$0xff]
        %v601 = vld [vmem:[%s281 + $0x40] sm:$0xff]
        %v602 = vld [vmem:[%s281 + $0x48] sm:$0xff]
        %v603 = vld [vmem:[%s281 + $0x50] sm:$0xff]
        %v604 = vld [vmem:[%s281 + $0x58] sm:$0xff]
        %v605 = vld [vmem:[%s281 + $0x60] sm:$0xff]
        %v606 = vld [vmem:[%s281 + $0x68] sm:$0xff]
        %v607 = vld [vmem:[%s281 + $0x70] sm:$0xff]
        %v608 = vld [vmem:[%s281 + $0x78] sm:$0xff]
        %v609 = vld [vmem:[%s281 + $0x80] sm:$0xff]
        %v610 = vld [vmem:[%s281 + $0x88] sm:$0xff]
        %v611 = vld [vmem:[%s281 + $0x90] sm:$0xff]
        %v612 = vld [vmem:[%s281 + $0x98] sm:$0xff]
        %v613 = vld [vmem:[%s281 + $0xa0] sm:$0xff]
        %v614 = vld [vmem:[%s281 + $0xa8] sm:$0xff]
        %v615 = vld [vmem:[%s281 + $0xb0] sm:$0xff]
        %v616 = vld [vmem:[%s281 + $0xb8] sm:$0xff]
        %v617 = vld [vmem:[%s281 + $0xc0] sm:$0xff]
        %v618 = vld [vmem:[%s281 + $0xc8] sm:$0xff]
        %v619 = vld [vmem:[%s281 + $0xd0] sm:$0xff]
        %v620 = vld [vmem:[%s281 + $0xd8] sm:$0xff]
        %v621 = vld [vmem:[%s281 + $0xe0] sm:$0xff]
        %v622 = vld [vmem:[%s281 + $0xe8] sm:$0xff]
        %v623 = vld [vmem:[%s281 + $0xf0] sm:$0xff]
        %v624 = vld [vmem:[%s281 + $0xf8] sm:$0xff]
        %v625 = vld [vmem:[%s281 + $0x100] sm:$0xff]
        %v626 = vld [vmem:[%s281 + $0x108] sm:$0xff]
        %v627 = vld [vmem:[%s281 + $0x110] sm:$0xff]
        %v628 = vld [vmem:[%s281 + $0x118] sm:$0xff]
        %v629 = vld [vmem:[%s281 + $0x120] sm:$0xff]
        %v630 = vld [vmem:[%s281 + $0x128] sm:$0xff]
        %v631 = vld [vmem:[%s281 + $0x130] sm:$0xff]
        %v632 = vld [vmem:[%s281 + $0x138] sm:$0xff]
        %v633 = vld [vmem:[%s281 + $0x140] sm:$0xff]
        %v634 = vld [vmem:[%s281 + $0x148] sm:$0xff]
        %v635 = vld [vmem:[%s281 + $0x150] sm:$0xff]
        %v636 = vld [vmem:[%s281 + $0x158] sm:$0xff]
        %v637 = vld [vmem:[%s281 + $0x160] sm:$0xff]
        %v638 = vld [vmem:[%s281 + $0x168] sm:$0xff]
        %v639 = vld [vmem:[%s281 + $0x170] sm:$0xff]
        %v640 = vld [vmem:[%s281 + $0x178] sm:$0xff]
        %v641 = vld [vmem:[%s281 + $0x180] sm:$0xff]
        %v642 = vld [vmem:[%s281 + $0x188] sm:$0xff]
        %v643 = vld [vmem:[%s281 + $0x190] sm:$0xff]
        %v644 = vld [vmem:[%s281 + $0x198] sm:$0xff]
        %v645 = vld [vmem:[%s281 + $0x1a0] sm:$0xff]
        %v646 = vld [vmem:[%s281 + $0x1a8] sm:$0xff]
        %v647 = vld [vmem:[%s281 + $0x1b0] sm:$0xff]
        %v648 = vld [vmem:[%s281 + $0x1b8] sm:$0xff]
        %v649 = vld [vmem:[%s281 + $0x1c0] sm:$0xff]
        %v650 = vld [vmem:[%s281 + $0x1c8] sm:$0xff]
        %v651 = vld [vmem:[%s281 + $0x1d0] sm:$0xff]
        %v652 = vld [vmem:[%s281 + $0x1d8] sm:$0xff]
        %v653 = vld [vmem:[%s281 + $0x1e0] sm:$0xff]
        %v654 = vld [vmem:[%s281 + $0x1e8] sm:$0xff]
        %v655 = vld [vmem:[%s281 + $0x1f0] sm:$0xff]
        %v656 = vld [vmem:[%s281 + $0x1f8] sm:$0xff]
        %v657 = vld [vmem:[%s287] sm:$0xf]
        %v658 = vld [vmem:[%s287 + $0x4] sm:$0xf]
        %v659 = vld [vmem:[%s287 + $0x8] sm:$0xf]
        %v660 = vld [vmem:[%s287 + $0xc] sm:$0xf]
        %v661 = vld [vmem:[%s287 + $0x10] sm:$0xf]
        %v662 = vld [vmem:[%s287 + $0x14] sm:$0xf]
        %v663 = vld [vmem:[%s287 + $0x18] sm:$0xf]
        %v664 = vld [vmem:[%s287 + $0x1c] sm:$0xf]
        %v665 = vld [vmem:[%s287 + $0x20] sm:$0xf]
        %v666 = vld [vmem:[%s287 + $0x24] sm:$0xf]
        %v667 = vld [vmem:[%s287 + $0x28] sm:$0xf]
        %v668 = vld [vmem:[%s287 + $0x2c] sm:$0xf]
        %v669 = vld [vmem:[%s287 + $0x30] sm:$0xf]
        %v670 = vld [vmem:[%s287 + $0x34] sm:$0xf]
        %v671 = vld [vmem:[%s287 + $0x38] sm:$0xf]
        %v672 = vld [vmem:[%s287 + $0x3c] sm:$0xf]
        %v673 = vld [vmem:[%s287 + $0x40] sm:$0xf]
        %v674 = vld [vmem:[%s287 + $0x44] sm:$0xf]
        %v675 = vld [vmem:[%s287 + $0x48] sm:$0xf]
        %v676 = vld [vmem:[%s287 + $0x4c] sm:$0xf]
        %v677 = vld [vmem:[%s287 + $0x50] sm:$0xf]
        %v678 = vld [vmem:[%s287 + $0x54] sm:$0xf]
        %v679 = vld [vmem:[%s287 + $0x58] sm:$0xf]
        %v680 = vld [vmem:[%s287 + $0x5c] sm:$0xf]
        %v681 = vld [vmem:[%s287 + $0x60] sm:$0xf]
        %v682 = vld [vmem:[%s287 + $0x64] sm:$0xf]
        %v683 = vld [vmem:[%s287 + $0x68] sm:$0xf]
        %v684 = vld [vmem:[%s287 + $0x6c] sm:$0xf]
        %v685 = vld [vmem:[%s287 + $0x70] sm:$0xf]
        %v686 = vld [vmem:[%s287 + $0x74] sm:$0xf]
        %v687 = vld [vmem:[%s287 + $0x78] sm:$0xf]
        %v688 = vld [vmem:[%s287 + $0x7c] sm:$0xf]
        %v689 = vld [vmem:[%s287 + $0x80] sm:$0xf]
        %v690 = vld [vmem:[%s287 + $0x84] sm:$0xf]
        %v691 = vld [vmem:[%s287 + $0x88] sm:$0xf]
        %v692 = vld [vmem:[%s287 + $0x8c] sm:$0xf]
        %v693 = vld [vmem:[%s287 + $0x90] sm:$0xf]
        %v694 = vld [vmem:[%s287 + $0x94] sm:$0xf]
        %v695 = vld [vmem:[%s287 + $0x98] sm:$0xf]
        %v696 = vld [vmem:[%s287 + $0x9c] sm:$0xf]
        %v697 = vld [vmem:[%s287 + $0xa0] sm:$0xf]
        %v698 = vld [vmem:[%s287 + $0xa4] sm:$0xf]
        %v699 = vld [vmem:[%s287 + $0xa8] sm:$0xf]
        %v700 = vld [vmem:[%s287 + $0xac] sm:$0xf]
        %v701 = vld [vmem:[%s287 + $0xb0] sm:$0xf]
        %v702 = vld [vmem:[%s287 + $0xb4] sm:$0xf]
        %v703 = vld [vmem:[%s287 + $0xb8] sm:$0xf]
        %v704 = vld [vmem:[%s287 + $0xbc] sm:$0xf]
        %v705 = vld [vmem:[%s287 + $0xc0] sm:$0xf]
        %v706 = vld [vmem:[%s287 + $0xc4] sm:$0xf]
        %v707 = vld [vmem:[%s287 + $0xc8] sm:$0xf]
        %v708 = vld [vmem:[%s287 + $0xcc] sm:$0xf]
        %v709 = vld [vmem:[%s287 + $0xd0] sm:$0xf]
        %v710 = vld [vmem:[%s287 + $0xd4] sm:$0xf]
        %v711 = vld [vmem:[%s287 + $0xd8] sm:$0xf]
        %v712 = vld [vmem:[%s287 + $0xdc] sm:$0xf]
        %v713 = vld [vmem:[%s287 + $0xe0] sm:$0xf]
        %v714 = vld [vmem:[%s287 + $0xe4] sm:$0xf]
        %v715 = vld [vmem:[%s287 + $0xe8] sm:$0xf]
        %v716 = vld [vmem:[%s287 + $0xec] sm:$0xf]
        %v717 = vld [vmem:[%s287 + $0xf0] sm:$0xf]
        %v718 = vld [vmem:[%s287 + $0xf4] sm:$0xf]
        %v719 = vld [vmem:[%s287 + $0xf8] sm:$0xf]
        %v720 = vld [vmem:[%s287 + $0xfc] sm:$0xf]
        %v721 = vunpack.c.l.bf16 %v657
        %v722 = vunpack.c.l.bf16 %v658
        %v723 = vunpack.c.l.bf16 %v659
        %v724 = vunpack.c.l.bf16 %v660
        %v725 = vunpack.c.l.bf16 %v661
        %v726 = vunpack.c.l.bf16 %v662
        %v727 = vunpack.c.l.bf16 %v663
        %v728 = vunpack.c.l.bf16 %v664
        %v729 = vunpack.c.l.bf16 %v665
        %v730 = vunpack.c.l.bf16 %v666
        %v731 = vunpack.c.l.bf16 %v667
        %v732 = vunpack.c.l.bf16 %v668
        %v733 = vunpack.c.l.bf16 %v669
        %v734 = vunpack.c.l.bf16 %v670
        %v735 = vunpack.c.l.bf16 %v671
        %v736 = vunpack.c.l.bf16 %v672
        %v737 = vunpack.c.l.bf16 %v673
        %v738 = vunpack.c.l.bf16 %v674
        %v739 = vunpack.c.l.bf16 %v675
        %v740 = vunpack.c.l.bf16 %v676
        %v741 = vunpack.c.l.bf16 %v677
        %v742 = vunpack.c.l.bf16 %v678
        %v743 = vunpack.c.l.bf16 %v679
        %v744 = vunpack.c.l.bf16 %v680
        %v745 = vunpack.c.l.bf16 %v681
        %v746 = vunpack.c.l.bf16 %v682
        %v747 = vunpack.c.l.bf16 %v683
        %v748 = vunpack.c.l.bf16 %v684
        %v749 = vunpack.c.l.bf16 %v685
        %v750 = vunpack.c.l.bf16 %v686
        %v751 = vunpack.c.l.bf16 %v687
        %v752 = vunpack.c.l.bf16 %v688
        %v753 = vunpack.c.l.bf16 %v689
        %v754 = vunpack.c.l.bf16 %v690
        %v755 = vunpack.c.l.bf16 %v691
        %v756 = vunpack.c.l.bf16 %v692
        %v757 = vunpack.c.l.bf16 %v693
        %v758 = vunpack.c.l.bf16 %v694
        %v759 = vunpack.c.l.bf16 %v695
        %v760 = vunpack.c.l.bf16 %v696
        %v761 = vunpack.c.l.bf16 %v697
        %v762 = vunpack.c.l.bf16 %v698
        %v763 = vunpack.c.l.bf16 %v699
        %v764 = vunpack.c.l.bf16 %v700
        %v765 = vunpack.c.l.bf16 %v701
        %v766 = vunpack.c.l.bf16 %v702
        %v767 = vunpack.c.l.bf16 %v703
        %v768 = vunpack.c.l.bf16 %v704
        %v769 = vunpack.c.l.bf16 %v705
        %v770 = vunpack.c.l.bf16 %v706
        %v771 = vunpack.c.l.bf16 %v707
        %v772 = vunpack.c.l.bf16 %v708
        %v773 = vunpack.c.l.bf16 %v709
        %v774 = vunpack.c.l.bf16 %v710
        %v775 = vunpack.c.l.bf16 %v711
        %v776 = vunpack.c.l.bf16 %v712
        %v777 = vunpack.c.l.bf16 %v713
        %v778 = vunpack.c.l.bf16 %v714
        %v779 = vunpack.c.l.bf16 %v715
        %v780 = vunpack.c.l.bf16 %v716
        %v781 = vunpack.c.l.bf16 %v717
        %v782 = vunpack.c.l.bf16 %v718
        %v783 = vunpack.c.l.bf16 %v719
        %v784 = vunpack.c.l.bf16 %v720
        %v785 = vmul.f32 %v593, %v721
        %v786 = vmul.f32 %v594, %v722
        %v787 = vmul.f32 %v595, %v723
        %v788 = vmul.f32 %v596, %v724
        %v789 = vmul.f32 %v597, %v725
        %v790 = vmul.f32 %v598, %v726
        %v791 = vmul.f32 %v599, %v727
        %v792 = vmul.f32 %v600, %v728
        %v793 = vmul.f32 %v601, %v729
        %v794 = vmul.f32 %v602, %v730
        %v795 = vmul.f32 %v603, %v731
        %v796 = vmul.f32 %v604, %v732
        %v797 = vmul.f32 %v605, %v733
        %v798 = vmul.f32 %v606, %v734
        %v799 = vmul.f32 %v607, %v735
        %v800 = vmul.f32 %v608, %v736
        %v801 = vmul.f32 %v609, %v737
        %v802 = vmul.f32 %v610, %v738
        %v803 = vmul.f32 %v611, %v739
        %v804 = vmul.f32 %v612, %v740
        %v805 = vmul.f32 %v613, %v741
        %v806 = vmul.f32 %v614, %v742
        %v807 = vmul.f32 %v615, %v743
        %v808 = vmul.f32 %v616, %v744
        %v809 = vmul.f32 %v617, %v745
        %v810 = vmul.f32 %v618, %v746
        %v811 = vmul.f32 %v619, %v747
        %v812 = vmul.f32 %v620, %v748
        %v813 = vmul.f32 %v621, %v749
        %v814 = vmul.f32 %v622, %v750
        %v815 = vmul.f32 %v623, %v751
        %v816 = vmul.f32 %v624, %v752
        %v817 = vmul.f32 %v625, %v753
        %v818 = vmul.f32 %v626, %v754
        %v819 = vmul.f32 %v627, %v755
        %v820 = vmul.f32 %v628, %v756
        %v821 = vmul.f32 %v629, %v757
        %v822 = vmul.f32 %v630, %v758
        %v823 = vmul.f32 %v631, %v759
        %v824 = vmul.f32 %v632, %v760
        %v825 = vmul.f32 %v633, %v761
        %v826 = vmul.f32 %v634, %v762
        %v827 = vmul.f32 %v635, %v763
        %v828 = vmul.f32 %v636, %v764
        %v829 = vmul.f32 %v637, %v765
        %v830 = vmul.f32 %v638, %v766
        %v831 = vmul.f32 %v639, %v767
        %v832 = vmul.f32 %v640, %v768
        %v833 = vmul.f32 %v641, %v769
        %v834 = vmul.f32 %v642, %v770
        %v835 = vmul.f32 %v643, %v771
        %v836 = vmul.f32 %v644, %v772
        %v837 = vmul.f32 %v645, %v773
        %v838 = vmul.f32 %v646, %v774
        %v839 = vmul.f32 %v647, %v775
        %v840 = vmul.f32 %v648, %v776
        %v841 = vmul.f32 %v649, %v777
        %v842 = vmul.f32 %v650, %v778
        %v843 = vmul.f32 %v651, %v779
        %v844 = vmul.f32 %v652, %v780
        %v845 = vmul.f32 %v653, %v781
        %v846 = vmul.f32 %v654, %v782
        %v847 = vmul.f32 %v655, %v783
        %v848 = vmul.f32 %v656, %v784
        %s849 = smul.u32 %s19, 512
        %v850 = vld [vmem:[#allocation3] sm:$0x3]
        %s851 = sshra.s32 %s849, 7
        %s852 = sand.u32 %s849, 127
        %s853 = smul.addr %s851, 2
        %s854 = scalar_lea.vmem [#allocation2], %s853
        %v855 = vld [vmem:[%s854] sm:$0xff]
        %857 = vst [vmem:[#allocation1] ss:$4 sm:$0xff] %v855
        %v858 = vld.sshfl [vmem:[#allocation1] sm:$0xff pattern:$0x73625140]
        %v859 = vld.sshfl [vmem:[#allocation1 + $0x8] sm:$0xff pattern:$0x73625140]
        %v860 = vld.sshfl [vmem:[#allocation1 + $0x10] sm:$0xff pattern:$0x73625140]
        %v861 = vld.sshfl [vmem:[#allocation1 + $0x18] sm:$0xff pattern:$0x73625140]
        %866 = vmatpush.msra.mxu0 %v800
        %867 = vmatpush.msra.mxu0 %v799
        %868 = vmatpush.msra.mxu0 %v798
        %869 = vmatpush.msra.mxu0 %v797
        %870 = vmatpush.msra.mxu0 %v796
        %871 = vmatpush.msra.mxu0 %v795
        %872 = vmatpush.msra.mxu0 %v794
        %873 = vmatpush.msra.mxu0 %v793
        %874 = vmatpush.msra.mxu0 %v792
        %875 = vmatpush.msra.mxu0 %v791
        %876 = vmatpush.msra.mxu0 %v790
        %877 = vmatpush.msra.mxu0 %v789
        %878 = vmatpush.msra.mxu0 %v788
        %879 = vmatpush.msra.mxu0 %v787
        %880 = vmatpush.msra.mxu0 %v786
        %881 = vmatpush.msra.mxu0 %v785
        %882 = vmatmul.f32.gmra.mxu0 %v858
        %v883 = vpop.f32.mrf.mxu0
        %v884 = vadd.f32 0.0, %v883
        %885 = vdwg.mxu0
        %886 = vmatpush.msra.mxu0 %v816
        %887 = vmatpush.msra.mxu0 %v815
        %888 = vmatpush.msra.mxu0 %v814
        %889 = vmatpush.msra.mxu0 %v813
        %890 = vmatpush.msra.mxu0 %v812
        %891 = vmatpush.msra.mxu0 %v811
        %892 = vmatpush.msra.mxu0 %v810
        %893 = vmatpush.msra.mxu0 %v809
        %894 = vmatpush.msra.mxu0 %v808
        %895 = vmatpush.msra.mxu0 %v807
        %896 = vmatpush.msra.mxu0 %v806
        %897 = vmatpush.msra.mxu0 %v805
        %898 = vmatpush.msra.mxu0 %v804
        %899 = vmatpush.msra.mxu0 %v803
        %900 = vmatpush.msra.mxu0 %v802
        %901 = vmatpush.msra.mxu0 %v801
        %902 = vmatmul.f32.gmra.mxu0 %v859
        %v903 = vpop.f32.mrf.mxu0
        %v904 = vadd.f32 %v884, %v903
        %905 = vdwg.mxu0
        %906 = vmatpush.msra.mxu0 %v832
        %907 = vmatpush.msra.mxu0 %v831
        %908 = vmatpush.msra.mxu0 %v830
        %909 = vmatpush.msra.mxu0 %v829
        %910 = vmatpush.msra.mxu0 %v828
        %911 = vmatpush.msra.mxu0 %v827
        %912 = vmatpush.msra.mxu0 %v826
        %913 = vmatpush.msra.mxu0 %v825
        %914 = vmatpush.msra.mxu0 %v824
        %915 = vmatpush.msra.mxu0 %v823
        %916 = vmatpush.msra.mxu0 %v822
        %917 = vmatpush.msra.mxu0 %v821
        %918 = vmatpush.msra.mxu0 %v820
        %919 = vmatpush.msra.mxu0 %v819
        %920 = vmatpush.msra.mxu0 %v818
        %921 = vmatpush.msra.mxu0 %v817
        %922 = vmatmul.f32.gmra.mxu0 %v860
        %v923 = vpop.f32.mrf.mxu0
        %v924 = vadd.f32 %v904, %v923
        %925 = vdwg.mxu0
        %926 = vmatpush.msra.mxu0 %v848
        %927 = vmatpush.msra.mxu0 %v847
        %928 = vmatpush.msra.mxu0 %v846
        %929 = vmatpush.msra.mxu0 %v845
        %930 = vmatpush.msra.mxu0 %v844
        %931 = vmatpush.msra.mxu0 %v843
        %932 = vmatpush.msra.mxu0 %v842
        %933 = vmatpush.msra.mxu0 %v841
        %934 = vmatpush.msra.mxu0 %v840
        %935 = vmatpush.msra.mxu0 %v839
        %936 = vmatpush.msra.mxu0 %v838
        %937 = vmatpush.msra.mxu0 %v837
        %938 = vmatpush.msra.mxu0 %v836
        %939 = vmatpush.msra.mxu0 %v835
        %940 = vmatpush.msra.mxu0 %v834
        %941 = vmatpush.msra.mxu0 %v833
        %942 = vmatmul.f32.gmra.mxu0 %v861
        %v943 = vpop.f32.mrf.mxu0
        %v944 = vadd.f32 %v924, %v943
        %945 = vdwg.mxu0
        %v946 = vadd.f32 %v850, %v944
        %vm947 = vcmask 254976
        %948 = vst.msk [vmem:[#allocation3] sm:$0x3] %vm947, %v946
        %p949 = scmp.eq.s32.totalorder %s19, 3
        // Predicated region
        $region53: #{mc_dropout_connect_forward.1} parent=47 // pred_check
          %p950 = pneg %p949
        $region54: #{mc_dropout_connect_forward.1} parent=47 // pred_check_branch
          %952 = sbr.rel (%p950) target = $region56
        $region55: #{mc_dropout_connect_forward.1} parent=47 // pred_region
          %v953 = vld [vmem:[#allocation3] sm:$0x3]
          %v954 = vld [vmem:[%s6] sm:$0x1]
          %v956 = vperm.slane %v954, 0
          %v958 = vadd.f32 %v953, %v956
          %959 = vst.msk [vmem:[#allocation3] sm:$0x3] %vm947, %v958
        $region56: #{mc_dropout_connect_forward.1} parent=47 // pred_fallthru
          _
        // Predicated region
        $region57: #{mc_dropout_connect_forward.1} parent=47 // pred_check
          %p960 = pneg %p189
        $region58: #{mc_dropout_connect_forward.1} parent=47 // pred_check_branch
          %962 = sbr.rel (%p960) target = $region60
        $region59: #{mc_dropout_connect_forward.1} parent=47 // pred_region
          %964 = vsyncadd [#allocation4], 0
          %s966 = sshll.u32 [#allocation3], 4
          %s967 = int_to_ptr.vmem [resolvable:$true] %s966
          %s968 = sshll.u32 %s7, 4
          %s969 = int_to_ptr.hbm [resolvable:$true] %s968
          %971 = dma.vmem_to_hbm [thread:$0]  %s967, 32, %s969, [#allocation4]
        $region60: #{mc_dropout_connect_forward.1} parent=47 // pred_fallthru
          _
        // Predicated region
        $region61: #{mc_dropout_connect_forward.1} parent=47 // pred_check
          %p972 = pneg %p189
        $region62: #{mc_dropout_connect_forward.1} parent=47 // pred_check_branch
          %974 = sbr.rel (%p972) target = $region64
        $region63: #{mc_dropout_connect_forward.1} parent=47 // pred_region
          %976 = dma.done [#allocation4], 32
        $region64: #{mc_dropout_connect_forward.1} parent=47 // pred_fallthru
          _
      $region48: #{mc_dropout_connect_forward.1} parent=5 // pred_fallthru
        _
      %p977 = scmp.le.s32.totalorder 2, %s14
      // Predicated region
      $region65: #{mc_dropout_connect_forward.1} parent=5 // pred_check
        %p978 = pneg %p977
      $region66: #{mc_dropout_connect_forward.1} parent=5 // pred_check_branch
        %980 = sbr.rel (%p978) target = $region68
      $region67: #{mc_dropout_connect_forward.1} parent=5 // pred_region
        %s981 = ssub.s32 %s14, 2
      $region68: #{mc_dropout_connect_forward.1} parent=5 // pred_fallthru
        _
    $region6: #{mc_dropout_connect_forward.1} parent=1 // loop_footer
      %s18 = sadd.s32 1, %s14
    $region7: #{mc_dropout_connect_forward.1} parent=1 // loop_footer_branch
      %13 = sbr.rel target = $region3
    $region8: #{mc_dropout_connect_forward.1} parent=1 // loop_exit
      _
    %982 = vsyncpa [#allocation4], 1
    %s983 = scalar_lea.sflag [#allocation4], 1
    %984 = vsyncpa %s983, 1

</llo_original>
